<compile_context>
chip_gen: v6e
topology: v6e:2x2x1
jax: 0.10.0
libtpu: 0.0.40
codegen_flags: <defaults>
</compile_context>

<pallas_src>
import functools

import jax
import jax.numpy as jnp
import numpy as np
from jax.experimental import pallas as pl
from jax.experimental.pallas import tpu as pltpu

HEADS = 8   # EGConv default num_heads
BASES = 4   # EGConv default num_bases


def _round_up(x, m):
    return ((x + m - 1) // m) * m


def _pick_tile(dim, pref, quantum):
    """Largest tile <= pref that divides dim and is a multiple of `quantum`.
    Inputs are always padded so that `quantum` itself divides `dim`."""
    if dim <= pref:
        return dim
    t = pref
    while t >= quantum:
        if dim % t == 0:
            return t
        t //= 2
    return dim  # unreachable with padded dims; kept as a safe fallback


# ----------------------------------------------------------------------------
# Kernels
# ----------------------------------------------------------------------------
def proj_kernel(x_ref, w_ref, b_ref, bf_ref, wts_ref, *, bd):
    """Fused bases_lin + comb_lin projection: one bf16 matmul, two outputs."""
    p = jnp.dot(x_ref[...], w_ref[...],
                preferred_element_type=jnp.float32) + b_ref[...]
    bf_ref[...] = p[:, :bd].astype(jnp.bfloat16)   # bases features (bf16)
    wts_ref[...] = p[:, bd:]                        # combination weights (f32)


def _accumulate_step(s_ref, bf_ref, acc_ref, *, tki, resident):
    """One reduction step of S @ bases with an f32 accumulator."""
    k = pl.program_id(1)

    @pl.when(k == 0)
    def _():
        acc_ref[...] = jnp.zeros_like(acc_ref)

    if resident:
        koff = pl.multiple_of(k * tki, tki)
        b_blk = bf_ref[pl.ds(koff, tki), :]         # slice the resident bases
    else:
        b_blk = bf_ref[...]                          # streamed per-k tile
    acc_ref[...] += jnp.dot(s_ref[...], b_blk,
                            preferred_element_type=jnp.float32)


def _combine_and_project(agg, wts, rsel_ref, tsel_ref, bias_ref, wn_ref,
                         bn_ref, *, bases, relu):
    """Per-head basis combination via 0/1 selector matmuls, bias, (ReLU),
    then the fused downstream projection  h @ Wn + bn."""
    out = None
    for b in range(bases):
        # column h*dh+d of (wts @ rsel[b]) equals wts[:, h*BASES+b]
        w_exp = jnp.dot(wts, rsel_ref[b], preferred_element_type=jnp.float32)
        # column h*dh+d of (agg @ tsel[b]) equals agg[:, b*dh+d]
        a_exp = jnp.dot(agg, tsel_ref[b], preferred_element_type=jnp.float32)
        term = w_exp * a_exp
        out = term if out is None else out + term
    out = out + bias_ref[...]
    if relu:
        out = jnp.maximum(out, 0.0)
    return jnp.dot(out.astype(jnp.bfloat16), wn_ref[...],
                   preferred_element_type=jnp.float32) + bn_ref[...]


def agg_proj_kernel(s_ref, bf_ref, wts_ref, rsel_ref, tsel_ref, bias_ref,
                    wn_ref, bn_ref, bf_out_ref, wts_out_ref, acc_ref,
                    *, bases, tki, resident, relu, split):
    """Aggregation + combine + fused next-layer projection (middle layer)."""
    _accumulate_step(s_ref, bf_ref, acc_ref, tki=tki, resident=resident)

    @pl.when(pl.program_id(1) == pl.num_programs(1) - 1)
    def _():
        p = _combine_and_project(acc_ref[...], wts_ref[...], rsel_ref,
                                 tsel_ref, bias_ref, wn_ref, bn_ref,
                                 bases=bases, relu=relu)
        bf_out_ref[...] = p[:, :split].astype(jnp.bfloat16)
        wts_out_ref[...] = p[:, split:]


def agg_cls_kernel(s_ref, bf_ref, wts_ref, rsel_ref, tsel_ref, bias_ref,
                   wn_ref, bn_ref, out_ref, acc_ref,
                   *, bases, tki, resident, relu):
    """Aggregation + combine + fused classifier node projection (last layer)."""
    _accumulate_step(s_ref, bf_ref, acc_ref, tki=tki, resident=resident)

    @pl.when(pl.program_id(1) == pl.num_programs(1) - 1)
    def _():
        out_ref[...] = _combine_and_project(acc_ref[...], wts_ref[...],
                                            rsel_ref, tsel_ref, bias_ref,
                                            wn_ref, bn_ref,
                                            bases=bases, relu=relu)


# ----------------------------------------------------------------------------
# Wrappers
# ----------------------------------------------------------------------------
def _proj_layer(x_bf16, w_fused_bf16, b_fused, bd, *, tm=1024):
    n_pad, c = x_bf16.shape
    cols = w_fused_bf16.shape[1]
    tmp = _pick_tile(n_pad, tm, 16)
    return pl.pallas_call(
        functools.partial(proj_kernel, bd=bd),
        grid_spec=pltpu.PrefetchScalarGridSpec(
            num_scalar_prefetch=0,
            grid=(n_pad // tmp,),
            in_specs=[pl.BlockSpec((tmp, c), lambda i: (i, 0)),
                      pl.BlockSpec((c, cols), lambda i: (0, 0)),
                      pl.BlockSpec((1, cols), lambda i: (0, 0))],
            out_specs=[pl.BlockSpec((tmp, bd), lambda i: (i, 0)),
                       pl.BlockSpec((tmp, cols - bd), lambda i: (i, 0))]),
        out_shape=(jax.ShapeDtypeStruct((n_pad, bd), jnp.bfloat16),
                   jax.ShapeDtypeStruct((n_pad, cols - bd), jnp.float32)),
        compiler_params=pltpu.CompilerParams(
            dimension_semantics=("parallel",)),
    )(x_bf16, w_fused_bf16, b_fused)


def _agg_layer(s_bf16, bfeat, wts, rsel, tsel, bias, wn_bf16, bn,
               *, relu, split, tm=1024, tk=1024):
    n_pad, bd = bfeat.shape
    hb = wts.shape[1]
    hidden = bias.shape[-1]
    wn_cols = wn_bf16.shape[1]

    tmi = _pick_tile(n_pad, tm, 16)    # bf16 sublane quantum
    tki = _pick_tile(n_pad, tk, 128)   # lane quantum
    grid = (n_pad // tmi, n_pad // tki)

    # keep the bases operand VMEM-resident when it fits a conservative budget
    resident = (n_pad * bd * 2) <= 24 * 1024 * 1024
    if resident:
        bf_spec = pl.BlockSpec((n_pad, bd), lambda i, k: (0, 0))
        bf_bytes = 2 * n_pad * bd * 2
    else:
        bf_spec = pl.BlockSpec((tki, bd), lambda i, k: (k, 0))
        bf_bytes = 2 * tki * bd * 2

    est = (2 * tmi * tki * 2 + bf_bytes + 2 * tmi * hb * 4
           + BASES * hb * hidden * 4 + BASES * bd * hidden * 4
           + hidden * 4 + wn_bf16.size * 2 + bn.size * 4
           + tmi * bd * 4 + 2 * tmi * wn_cols * 4)
    vmem_limit = int(min(max(2 * est, 32 * 1024 * 1024), 56 * 1024 * 1024))

    in_specs = [pl.BlockSpec((tmi, tki), lambda i, k: (i, k)),        # S tile
                bf_spec,                                               # bases
                pl.BlockSpec((tmi, hb), lambda i, k: (i, 0)),          # comb wts
                pl.BlockSpec((BASES, hb, hidden), lambda i, k: (0, 0, 0)),
                pl.BlockSpec((BASES, bd, hidden), lambda i, k: (0, 0, 0)),
                pl.BlockSpec((1, hidden), lambda i, k: (0, 0)),        # bias
                pl.BlockSpec((hidden, wn_cols), lambda i, k: (0, 0)),  # fused W
                pl.BlockSpec((1, wn_cols), lambda i, k: (0, 0))]       # fused b

    if split is None:
        kernel = functools.partial(agg_cls_kernel, bases=BASES, tki=tki,
                                   resident=resident, relu=relu)
        out_specs = pl.BlockSpec((tmi, wn_cols), lambda i, k: (i, 0))
        out_shape = jax.ShapeDtypeStruct((n_pad, wn_cols), jnp.float32)
    else:
        kernel = functools.partial(agg_proj_kernel, bases=BASES, tki=tki,
                                   resident=resident, relu=relu, split=split)
        out_specs = [pl.BlockSpec((tmi, split), lambda i, k: (i, 0)),
                     pl.BlockSpec((tmi, wn_cols - split), lambda i, k: (i, 0))]
        out_shape = (jax.ShapeDtypeStruct((n_pad, split), jnp.bfloat16),
                     jax.ShapeDtypeStruct((n_pad, wn_cols - split), jnp.float32))

    return pl.pallas_call(
        kernel,
        grid_spec=pltpu.PrefetchScalarGridSpec(
            num_scalar_prefetch=0,
            grid=grid,
            in_specs=in_specs,
            out_specs=out_specs,
            scratch_shapes=[pltpu.VMEM((tmi, bd), jnp.float32)]),
        out_shape=out_shape,
        compiler_params=pltpu.CompilerParams(
            dimension_semantics=("parallel", "arbitrary"),
            vmem_limit_bytes=vmem_limit),
    )(s_bf16, bfeat, wts, rsel, tsel, bias, wn_bf16, bn)


def _selectors(hidden, dh):
    """0/1 selector tensors used by the per-head basis combination."""
    hb = HEADS * BASES
    bd = BASES * dh
    j = jnp.arange(hidden)
    head = j // dh
    d = j % dh
    b_idx = jnp.arange(BASES)[:, None, None]
    rsel = (jnp.arange(hb)[None, :, None]
            == head[None, None, :] * BASES + b_idx).astype(jnp.float32)
    tsel = (jnp.arange(bd)[None, :, None]
            == b_idx * dh + d[None, None, :]).astype(jnp.float32)
    return rsel, tsel


def build_symnorm(edge_index, n, n_pad):
    """gcn_norm / symnorm aggregator: S = D^{-1/2}(A + I_missing)D^{-1/2},
    padded with zero rows/cols to n_pad and stored in bf16."""
    row, col = edge_index[0], edge_index[1]
    a = jnp.zeros((n_pad, n_pad), jnp.float32).at[col, row].add(1.0)
    diag = jnp.diagonal(a)
    is_node = jnp.arange(n_pad) < n
    # add_remaining_self_loops: only add a self-loop where one is missing
    a = a + jnp.diag(jnp.where((diag == 0) & is_node, 1.0, 0.0))
    deg = a.sum(axis=1)
    dis = jnp.where(deg > 0, jax.lax.rsqrt(deg), 0.0)
    # TODO(synk): build S directly in the target dtype from a CSR edge list
    #             for large graphs instead of this dense O(N^2) scatter.
    return (dis[:, None] * a * dis[None, :]).astype(jnp.bfloat16)


def egconv_edge_classifier(x, edge_index, conv1, conv2, w_cls, b_cls,
                           *, tm=1024, tk=1024):
    n, in_ch = x.shape
    hidden1 = conv1["bias"].shape[-1]
    hidden2 = conv2["bias"].shape[-1]
    out_ch = w_cls.shape[-1]
    dh1, dh2 = hidden1 // HEADS, hidden2 // HEADS
    bd1, bd2 = BASES * dh1, BASES * dh2
    hb = HEADS * BASES

    n_pad = max(_round_up(n, 128), 128)
    x_p = jnp.zeros((n_pad, in_ch), jnp.float32).at[:n].set(x)
    x_p = x_p.astype(jnp.bfloat16)
    s = build_symnorm(edge_index, n, n_pad)

    rsel1, tsel1 = _selectors(hidden1, dh1)
    rsel2, tsel2 = _selectors(hidden2, dh2)

    # fused bases_lin|comb_lin weights (bases_lin has no bias)
    wf1 = jnp.concatenate([conv1["Wb"], conv1["Wc"]], 1).astype(jnp.bfloat16)
    bf1 = jnp.concatenate([jnp.zeros((1, bd1), jnp.float32), conv1["bc"]], 1)
    wf2 = jnp.concatenate([conv2["Wb"], conv2["Wc"]], 1).astype(jnp.bfloat16)
    bf2 = jnp.concatenate([jnp.zeros((1, bd2), jnp.float32), conv2["bc"]], 1)

    # classifier as per-node halves, padded to a lane-dense 128-wide slab
    cls_pad = max(_round_up(2 * out_ch, 128), 128)
    wcls = jnp.zeros((hidden2, cls_pad), jnp.float32)
    wcls = wcls.at[:, :out_ch].set(w_cls[:hidden2])
    wcls = wcls.at[:, out_ch:2 * out_ch].set(w_cls[hidden2:])
    wcls = wcls.astype(jnp.bfloat16)
    bcls = jnp.zeros((1, cls_pad), jnp.float32).at[:, :out_ch].set(b_cls)

    # conv1 projection
    bfeat1, wts1 = _proj_layer(x_p, wf1, bf1, bd1, tm=tm)
    # conv1 aggregation + ReLU + fused conv2 projection (h1 never hits HBM)
    bfeat2, wts2 = _agg_layer(s, bfeat1, wts1, rsel1, tsel1, conv1["bias"],
                              wf2, bf2, relu=True, split=bd2, tm=tm, tk=tk)
    # conv2 aggregation + fused classifier node projection (h2 never hits HBM)
    p12 = _agg_layer(s, bfeat2, wts2, rsel2, tsel2, conv2["bias"],
                     wcls, bcls, relu=False, split=None, tm=tm, tk=tk)

    row, col = edge_index[0], edge_index[1]
    # edge gather is out_ch-wide index glue: classifier(cat([h[r], h[c]]))
    return p12[row, :out_ch] + p12[col, out_ch:2 * out_ch]


# ----------------------------------------------------------------------------
# Pure-JAX reference (mirrors the kernel's bf16 quantization points)
# ----------------------------------------------------------------------------
def _reference_forward(x, edge_index, conv1, conv2, w_cls, b_cls):
    n = x.shape[0]
    row, col = edge_index[0], edge_index[1]
    s = build_symnorm(edge_index, n, n)   # bf16, unpadded

    def proj(h, Wb, Wc, bc):
        w = jnp.concatenate([Wb, Wc], 1).astype(jnp.bfloat16)
        p = jnp.dot(h.astype(jnp.bfloat16), w,
                    preferred_element_type=jnp.float32)
        bd = Wb.shape[1]
        return p[:, :bd].astype(jnp.bfloat16), p[:, bd:] + bc

    def combine(agg, wts, bias, relu, hidden):
        dh = hidden // HEADS
        out = jnp.zeros((agg.shape[0], hidden), jnp.float32)
        for hh in range(HEADS):
            for b in range(BASES):
                out = out.at[:, hh * dh:(hh + 1) * dh].add(
                    wts[:, hh * BASES + b:hh * BASES + b + 1]
                    * agg[:, b * dh:(b + 1) * dh])
        out = out + bias
        return jnp.maximum(out, 0.0) if relu else out

    h1d = conv1["bias"].shape[-1]
    h2d = conv2["bias"].shape[-1]
    bfe1, w1 = proj(x, conv1["Wb"], conv1["Wc"], conv1["bc"])
    agg1 = jnp.dot(s, bfe1, preferred_element_type=jnp.float32)
    h1 = combine(agg1, w1, conv1["bias"], True, h1d)
    bfe2, w2 = proj(h1, conv2["Wb"], conv2["Wc"], conv2["bc"])
    agg2 = jnp.dot(s, bfe2, preferred_element_type=jnp.float32)
    h2 = combine(agg2, w2, conv2["bias"], False, h2d)
    emb = jnp.concatenate([h2[row], h2[col]], axis=-1)
    return jnp.dot(emb.astype(jnp.bfloat16), w_cls.astype(jnp.bfloat16),
                   preferred_element_type=jnp.float32) + b_cls


# ----------------------------------------------------------------------------
# Demo / self-test
# ----------------------------------------------------------------------------
if __name__ == "__main__":
    key = jax.random.PRNGKey(0)
    N, E = 16, 32
    in_ch, hidden, out_ch = 8, 32, 4
    dh = hidden // HEADS

    ks = jax.random.split(key, 10)
    x = jax.random.normal(ks[0], (N, in_ch), jnp.float32)
    row = jax.random.randint(ks[1], (E,), 0, N)
    off = jax.random.randint(ks[2], (E,), 1, N)
    col = (row + off) % N          # no self loops in the raw graph
    edge_index = jnp.stack([row, col])

    def glorot(k, shape):
        lim = (6.0 / (shape[0] + shape[1])) ** 0.5
        return jax.random.uniform(k, shape, jnp.float32, -lim, lim)

    conv1 = dict(
        Wb=glorot(ks[3], (in_ch, BASES * dh)),        # bases_lin (no bias)
        Wc=glorot(ks[4], (in_ch, HEADS * BASES)),     # comb_lin
        bc=jnp.zeros((1, HEADS * BASES), jnp.float32),
        bias=jnp.full((1, hidden), 0.01, jnp.float32),
    )
    conv2 = dict(
        Wb=glorot(ks[5], (hidden, BASES * dh)),
        Wc=glorot(ks[6], (hidden, HEADS * BASES)),
        bc=jnp.zeros((1, HEADS * BASES), jnp.float32),
        bias=jnp.full((1, hidden), 0.01, jnp.float32),
    )
    w_cls = glorot(ks[7], (2 * hidden, out_ch))        # nn.Linear(2*hidden, out)
    b_cls = jnp.zeros((1, out_ch), jnp.float32)

    logits = egconv_edge_classifier(x, edge_index, conv1, conv2, w_cls, b_cls)
    jax.block_until_ready(logits)
    assert logits.shape == (E, out_ch)

    ref = _reference_forward(x, edge_index, conv1, conv2, w_cls, b_cls)
    np.testing.assert_allclose(np.asarray(logits), np.asarray(ref),
                               rtol=2e-2, atol=2e-2)
    print("KERNEL_OK")
</pallas_src>

<mosaic_0001>
module attributes {stable_mosaic.version = 11 : i64} {
  func.func @proj_kernel(%arg0: i32, %arg1: memref<128x8xbf16, #tpu.memory_space<vmem>>, %arg2: memref<8x48xbf16, #tpu.memory_space<vmem>>, %arg3: memref<1x48xf32, #tpu.memory_space<vmem>>, %arg4: memref<128x16xbf16, #tpu.memory_space<vmem>>, %arg5: memref<128x32xf32, #tpu.memory_space<vmem>>) attributes {dimension_semantics = [#tpu.dimension_semantics<parallel>], iteration_bounds = array<i64: 1>, scalar_prefetch = 0 : i64, scratch_operands = 0 : i64, tpu.core_type = #tpu.core_type<tc>, window_params = [{transform_indices = @transform_0, window_bounds = array<i64: 128, 8>}, {pipeline_mode = #tpu.pipeline_mode<synchronous>, transform_indices = @transform_1, window_bounds = array<i64: 8, 48>}, {pipeline_mode = #tpu.pipeline_mode<synchronous>, transform_indices = @transform_2, window_bounds = array<i64: 1, 48>}, {transform_indices = @transform_3, window_bounds = array<i64: 128, 16>}, {transform_indices = @transform_4, window_bounds = array<i64: 128, 32>}]} {
    %c0 = arith.constant 0 : index
    %c0_0 = arith.constant 0 : index
    %0 = vector.load %arg1[%c0, %c0_0] : memref<128x8xbf16, #tpu.memory_space<vmem>>, vector<128x8xbf16>
    %c0_1 = arith.constant 0 : index
    %c0_2 = arith.constant 0 : index
    %1 = vector.load %arg2[%c0_1, %c0_2] : memref<8x48xbf16, #tpu.memory_space<vmem>>, vector<8x48xbf16>
    %cst = arith.constant dense<0.000000e+00> : vector<128x48xf32>
    %2 = tpu.matmul %0, %1, %cst {dimension_numbers = #tpu.dot_dimension_numbers<[1], [0], [0], [1], [0, 0, 1, 1], [], []>} : vector<128x8xbf16>, vector<8x48xbf16>, vector<128x48xf32> -> vector<128x48xf32>
    %c0_3 = arith.constant 0 : index
    %c0_4 = arith.constant 0 : index
    %3 = vector.load %arg3[%c0_3, %c0_4] : memref<1x48xf32, #tpu.memory_space<vmem>>, vector<1x48xf32>
    %4 = vector.broadcast %3 : vector<1x48xf32> to vector<128x48xf32>
    %5 = arith.addf %2, %4 : vector<128x48xf32>
    %6 = vector.extract_strided_slice %5 {offsets = [0, 0], sizes = [128, 16], strides = [1, 1]} : vector<128x48xf32> to vector<128x16xf32>
    %7 = arith.truncf %6 : vector<128x16xf32> to vector<128x16xbf16>
    %c0_5 = arith.constant 0 : index
    %c0_6 = arith.constant 0 : index
    %8 = vector.load %arg4[%c0_5, %c0_6] : memref<128x16xbf16, #tpu.memory_space<vmem>>, vector<128x16xbf16>
    tpu.vector_store %arg4[%c0_5, %c0_6], %7 {strides = array<i32>} : memref<128x16xbf16, #tpu.memory_space<vmem>>, vector<128x16xbf16>,
    %9 = vector.extract_strided_slice %5 {offsets = [0, 16], sizes = [128, 32], strides = [1, 1]} : vector<128x48xf32> to vector<128x32xf32>
    %c0_7 = arith.constant 0 : index
    %c0_8 = arith.constant 0 : index
    %10 = vector.load %arg5[%c0_7, %c0_8] : memref<128x32xf32, #tpu.memory_space<vmem>>, vector<128x32xf32>
    tpu.vector_store %arg5[%c0_7, %c0_8], %9 {strides = array<i32>} : memref<128x32xf32, #tpu.memory_space<vmem>>, vector<128x32xf32>,
    return
  }
  func.func @transform_0(%arg0: i32) -> (i32, i32) {
    %c0_i32 = arith.constant 0 : i32
    %c0_i32_0 = arith.constant 0 : i32
    return %arg0, %c0_i32 : i32, i32
  }
  func.func @transform_1(%arg0: i32) -> (i32, i32) {
    %c0_i32 = arith.constant 0 : i32
    %c0_i32_0 = arith.constant 0 : i32
    %c0_i32_1 = arith.constant 0 : i32
    return %c0_i32, %c0_i32_0 : i32, i32
  }
  func.func @transform_2(%arg0: i32) -> (i32, i32) {
    %c0_i32 = arith.constant 0 : i32
    %c0_i32_0 = arith.constant 0 : i32
    %c0_i32_1 = arith.constant 0 : i32
    return %c0_i32, %c0_i32_0 : i32, i32
  }
  func.func @transform_3(%arg0: i32) -> (i32, i32) {
    %c0_i32 = arith.constant 0 : i32
    %c0_i32_0 = arith.constant 0 : i32
    return %arg0, %c0_i32 : i32, i32
  }
  func.func @transform_4(%arg0: i32) -> (i32, i32) {
    %c0_i32 = arith.constant 0 : i32
    %c0_i32_0 = arith.constant 0 : i32
    return %arg0, %c0_i32 : i32, i32
  }
}

</mosaic_0001>

<llo_original>
// kernel: tpu_custom_call.1
$region0: #{tpu_custom_call.1}
  #allocation0 [shape = 'u32[]', space=smem, size = 0x4, offset = 0x4, fixed_abs, tag = 'smem constant byte address 0x4 - core index']
  #allocation1 [shape = 'u32[144,128]{1,0:T(1,128)}', space=vmem, size = 0x12000, scoped, tag = 'internal scratch']
  %s0 = inlined_call_operand.vmem [shape: bf16[128,8], index: 0, kind: input, shape index: {}]
  %s1 = inlined_call_operand.vmem [shape: bf16[8,48], index: 1, kind: input, shape index: {}]
  %s2 = inlined_call_operand.vmem [shape: f32[1,48], index: 2, kind: input, shape index: {}]
  %s3 = inlined_call_operand.vmem [shape: bf16[128,16], index: 3, kind: output, shape index: {0}]
  %s4 = inlined_call_operand.vmem [shape: f32[128,32], index: 4, kind: output, shape index: {1}]
  %5 = xla_tuple %s3, %s4
  %s6 = sld [smem:[#allocation0]]
  $region30: #{tpu_custom_call.1} parent=0
    _
  %s8 = ssub.s32 1, %s6
  %s9 = scalar_select 0, %s8, %s6
  // Predicated region
  $region2: #{tpu_custom_call.1} parent=0 // pred_check
    _
  $region3: #{tpu_custom_call.1} parent=0 // pred_check_branch
    %11 = sbr.rel (0) target = $region5
  $region4: #{tpu_custom_call.1} parent=0 // pred_region
    _
  $region5: #{tpu_custom_call.1} parent=0 // pred_fallthru
    _
  // Predicated region
  $region6: #{tpu_custom_call.1} parent=0 // pred_check
    _
  $region7: #{tpu_custom_call.1} parent=0 // pred_check_branch
    %13 = sbr.rel (0) target = $region9
  $region8: #{tpu_custom_call.1} parent=0 // pred_region
    _
  $region9: #{tpu_custom_call.1} parent=0 // pred_fallthru
    _
  // Predicated region
  $region10: #{tpu_custom_call.1} parent=0 // pred_check
    _
  $region11: #{tpu_custom_call.1} parent=0 // pred_check_branch
    %15 = sbr.rel (0) target = $region13
  $region12: #{tpu_custom_call.1} parent=0 // pred_region
    _
  $region13: #{tpu_custom_call.1} parent=0 // pred_fallthru
    _
  %v17 = vld [vmem:[%s0] sm:$0xf]
  %v18 = vld [vmem:[%s0 + $0x4] sm:$0xf]
  %v19 = vld [vmem:[%s0 + $0x8] sm:$0xf]
  %v20 = vld [vmem:[%s0 + $0xc] sm:$0xf]
  %v21 = vld [vmem:[%s0 + $0x10] sm:$0xf]
  %v22 = vld [vmem:[%s0 + $0x14] sm:$0xf]
  %v23 = vld [vmem:[%s0 + $0x18] sm:$0xf]
  %v24 = vld [vmem:[%s0 + $0x1c] sm:$0xf]
  %v25 = vld [vmem:[%s0 + $0x20] sm:$0xf]
  %v26 = vld [vmem:[%s0 + $0x24] sm:$0xf]
  %v27 = vld [vmem:[%s0 + $0x28] sm:$0xf]
  %v28 = vld [vmem:[%s0 + $0x2c] sm:$0xf]
  %v29 = vld [vmem:[%s0 + $0x30] sm:$0xf]
  %v30 = vld [vmem:[%s0 + $0x34] sm:$0xf]
  %v31 = vld [vmem:[%s0 + $0x38] sm:$0xf]
  %v32 = vld [vmem:[%s0 + $0x3c] sm:$0xf]
  %v33 = vld [vmem:[%s1] sm:$0xf]
  %v34 = vld [vmem:[%s2] sm:$0x1]
  %v36 = vlaneseq
  %v37 = vshrl.u32 %v36, 7
  %v38 = vsub.s32 0, %v37
  %v39 = vrot.slane %v34, %v38
  %v57 = vunpack.c.l.b16 %v17
  %v58 = vunpack.c.l.b16 %v18
  %v59 = vunpack.c.l.b16 %v19
  %v60 = vunpack.c.l.b16 %v20
  %v61 = vunpack.c.l.b16 %v21
  %v62 = vunpack.c.l.b16 %v22
  %v63 = vunpack.c.l.b16 %v23
  %v64 = vunpack.c.l.b16 %v24
  %v65 = vunpack.c.l.b16 %v25
  %v66 = vunpack.c.l.b16 %v26
  %v67 = vunpack.c.l.b16 %v27
  %v68 = vunpack.c.l.b16 %v28
  %v69 = vunpack.c.l.b16 %v29
  %v70 = vunpack.c.l.b16 %v30
  %v71 = vunpack.c.l.b16 %v31
  %v72 = vunpack.c.l.b16 %v32
  %v73 = vpack.c.b16 %v58, %v57
  %v74 = vpack.c.b16 %v60, %v59
  %v75 = vpack.c.b16 %v62, %v61
  %v76 = vpack.c.b16 %v64, %v63
  %v77 = vpack.c.b16 %v66, %v65
  %v78 = vpack.c.b16 %v68, %v67
  %v79 = vpack.c.b16 %v70, %v69
  %v80 = vpack.c.b16 %v72, %v71
  %vm81 = vcmask 64512
  %v83 = vsel %vm81, %v73, 0
  %v86 = vsel %vm81, %v74, 0
  %v89 = vsel %vm81, %v75, 0
  %v92 = vsel %vm81, %v76, 0
  %v95 = vsel %vm81, %v77, 0
  %v98 = vsel %vm81, %v78, 0
  %v101 = vsel %vm81, %v79, 0
  %v104 = vsel %vm81, %v80, 0
  %vm106 = vcmask 1043456
  %v108 = vsel %vm106, %v33, 0
  %110 = vmatprep.subr.bf16.mxu0 0
  %111 = vmatpush1.bf16.msra.mxu0 0
  %112 = vmatprep.subr.bf16.mxu0 0
  %113 = vmatpush1.bf16.msra.mxu0 0
  %114 = vmatprep.subr.bf16.mxu0 0
  %115 = vmatpush1.bf16.msra.mxu0 0
  %116 = vmatprep.subr.bf16.mxu0 0
  %117 = vmatpush1.bf16.msra.mxu0 0
  %118 = vmatprep.subr.bf16.mxu0 0
  %119 = vmatpush1.bf16.msra.mxu0 0
  %120 = vmatprep.subr.bf16.mxu0 0
  %121 = vmatpush1.bf16.msra.mxu0 0
  %122 = vmatprep.subr.bf16.mxu0 0
  %123 = vmatpush1.bf16.msra.mxu0 0
  %124 = vmatprep.subr.bf16.mxu0 0
  %125 = vmatpush1.bf16.msra.mxu0 %v108
  %126 = vmatprep.subr.bf16.mxu0 0
  %127 = vmatpush2.bf16.msra.mxu0 0
  %128 = vmatprep.subr.bf16.mxu0 0
  %129 = vmatpush2.bf16.msra.mxu0 0
  %130 = vmatprep.subr.bf16.mxu0 0
  %131 = vmatpush2.bf16.msra.mxu0 0
  %132 = vmatprep.subr.bf16.mxu0 0
  %133 = vmatpush2.bf16.msra.mxu0 0
  %134 = vmatprep.subr.bf16.mxu0 0
  %135 = vmatpush2.bf16.msra.mxu0 0
  %136 = vmatprep.subr.bf16.mxu0 0
  %137 = vmatpush2.bf16.msra.mxu0 0
  %138 = vmatprep.subr.bf16.mxu0 0
  %139 = vmatpush2.bf16.msra.mxu0 0
  %140 = vmatprep.subr.bf16.mxu0 0
  %141 = vmatpush2.bf16.msra.mxu0 0
  %142 = vmatprep.mubr.bf16.mxu0 0
  %143 = vmatmul.mubr.bf16.gmra.mxu0 %v83
  %v144 = vpop.f32.mrf.mxu0
  %v145 = vadd.f32 %v39, %v144
  %v146 = vpop.f32.mrf.mxu0
  %v147 = vpop.f32.mrf.mxu0
  %v148 = vadd.f32 %v39, %v147
  %v149 = vpop.f32.mrf.mxu0
  %150 = vmatprep.mubr.bf16.mxu0 0
  %151 = vmatmul.mubr.bf16.gmra.mxu0 %v86
  %v152 = vpop.f32.mrf.mxu0
  %v153 = vadd.f32 %v39, %v152
  %v154 = vpop.f32.mrf.mxu0
  %v155 = vpop.f32.mrf.mxu0
  %v156 = vadd.f32 %v39, %v155
  %v157 = vpop.f32.mrf.mxu0
  %158 = vmatprep.mubr.bf16.mxu0 0
  %159 = vmatmul.mubr.bf16.gmra.mxu0 %v89
  %v160 = vpop.f32.mrf.mxu0
  %v161 = vadd.f32 %v39, %v160
  %v162 = vpop.f32.mrf.mxu0
  %v163 = vpop.f32.mrf.mxu0
  %v164 = vadd.f32 %v39, %v163
  %v165 = vpop.f32.mrf.mxu0
  %166 = vmatprep.mubr.bf16.mxu0 0
  %167 = vmatmul.mubr.bf16.gmra.mxu0 %v92
  %v168 = vpop.f32.mrf.mxu0
  %v169 = vadd.f32 %v39, %v168
  %v170 = vpop.f32.mrf.mxu0
  %v171 = vpop.f32.mrf.mxu0
  %v172 = vadd.f32 %v39, %v171
  %v173 = vpop.f32.mrf.mxu0
  %174 = vmatprep.mubr.bf16.mxu0 0
  %175 = vmatmul.mubr.bf16.gmra.mxu0 %v95
  %v176 = vpop.f32.mrf.mxu0
  %v177 = vadd.f32 %v39, %v176
  %v178 = vpop.f32.mrf.mxu0
  %v179 = vpop.f32.mrf.mxu0
  %v180 = vadd.f32 %v39, %v179
  %v181 = vpop.f32.mrf.mxu0
  %182 = vmatprep.mubr.bf16.mxu0 0
  %183 = vmatmul.mubr.bf16.gmra.mxu0 %v98
  %v184 = vpop.f32.mrf.mxu0
  %v185 = vadd.f32 %v39, %v184
  %v186 = vpop.f32.mrf.mxu0
  %v187 = vpop.f32.mrf.mxu0
  %v188 = vadd.f32 %v39, %v187
  %v189 = vpop.f32.mrf.mxu0
  %190 = vmatprep.mubr.bf16.mxu0 0
  %191 = vmatmul.mubr.bf16.gmra.mxu0 %v101
  %v192 = vpop.f32.mrf.mxu0
  %v193 = vadd.f32 %v39, %v192
  %v194 = vpop.f32.mrf.mxu0
  %v195 = vpop.f32.mrf.mxu0
  %v196 = vadd.f32 %v39, %v195
  %v197 = vpop.f32.mrf.mxu0
  %198 = vmatprep.mubr.bf16.mxu0 0
  %199 = vmatmul.mubr.bf16.gmra.mxu0 %v104
  %v200 = vpop.f32.mrf.mxu0
  %v201 = vadd.f32 %v39, %v200
  %v202 = vpop.f32.mrf.mxu0
  %v203 = vpop.f32.mrf.mxu0
  %v204 = vadd.f32 %v39, %v203
  %v205 = vpop.f32.mrf.mxu0
  %206 = vdwg.mxu0
  %v207 = vpack.c.bf16 %v148, %v145
  %v208 = vpack.c.bf16 %v156, %v153
  %v209 = vpack.c.bf16 %v164, %v161
  %v210 = vpack.c.bf16 %v172, %v169
  %v211 = vpack.c.bf16 %v180, %v177
  %v212 = vpack.c.bf16 %v188, %v185
  %v213 = vpack.c.bf16 %v196, %v193
  %v214 = vpack.c.bf16 %v204, %v201
  %v223 = vunpack.c.l.b16 %v207
  %v224 = vunpack.c.h.b16 %v207
  %v225 = vunpack.c.l.b16 %v208
  %v226 = vunpack.c.h.b16 %v208
  %v227 = vunpack.c.l.b16 %v209
  %v228 = vunpack.c.h.b16 %v209
  %v229 = vunpack.c.l.b16 %v210
  %v230 = vunpack.c.h.b16 %v210
  %v231 = vunpack.c.l.b16 %v211
  %v232 = vunpack.c.h.b16 %v211
  %v233 = vunpack.c.l.b16 %v212
  %v234 = vunpack.c.h.b16 %v212
  %v235 = vunpack.c.l.b16 %v213
  %v236 = vunpack.c.h.b16 %v213
  %v237 = vunpack.c.l.b16 %v214
  %v238 = vunpack.c.h.b16 %v214
  %v239 = vpack.c.b16 %v223, %v223
  %v240 = vpack.c.b16 %v224, %v224
  %v241 = vpack.c.b16 %v225, %v225
  %v242 = vpack.c.b16 %v226, %v226
  %v243 = vpack.c.b16 %v227, %v227
  %v244 = vpack.c.b16 %v228, %v228
  %v245 = vpack.c.b16 %v229, %v229
  %v246 = vpack.c.b16 %v230, %v230
  %v247 = vpack.c.b16 %v231, %v231
  %v248 = vpack.c.b16 %v232, %v232
  %v249 = vpack.c.b16 %v233, %v233
  %v250 = vpack.c.b16 %v234, %v234
  %v251 = vpack.c.b16 %v235, %v235
  %v252 = vpack.c.b16 %v236, %v236
  %v253 = vpack.c.b16 %v237, %v237
  %v254 = vpack.c.b16 %v238, %v238
  %vm271 = vcmask 125952
  %272 = vst.msk [vmem:[%s3] sm:$0xf] %vm271, %v239
  %273 = vst.msk [vmem:[%s3 + $0x4] sm:$0xf] %vm271, %v240
  %274 = vst.msk [vmem:[%s3 + $0x8] sm:$0xf] %vm271, %v241
  %275 = vst.msk [vmem:[%s3 + $0xc] sm:$0xf] %vm271, %v242
  %276 = vst.msk [vmem:[%s3 + $0x10] sm:$0xf] %vm271, %v243
  %277 = vst.msk [vmem:[%s3 + $0x14] sm:$0xf] %vm271, %v244
  %278 = vst.msk [vmem:[%s3 + $0x18] sm:$0xf] %vm271, %v245
  %279 = vst.msk [vmem:[%s3 + $0x1c] sm:$0xf] %vm271, %v246
  %280 = vst.msk [vmem:[%s3 + $0x20] sm:$0xf] %vm271, %v247
  %281 = vst.msk [vmem:[%s3 + $0x24] sm:$0xf] %vm271, %v248
  %282 = vst.msk [vmem:[%s3 + $0x28] sm:$0xf] %vm271, %v249
  %283 = vst.msk [vmem:[%s3 + $0x2c] sm:$0xf] %vm271, %v250
  %284 = vst.msk [vmem:[%s3 + $0x30] sm:$0xf] %vm271, %v251
  %285 = vst.msk [vmem:[%s3 + $0x34] sm:$0xf] %vm271, %v252
  %286 = vst.msk [vmem:[%s3 + $0x38] sm:$0xf] %vm271, %v253
  %287 = vst.msk [vmem:[%s3 + $0x3c] sm:$0xf] %vm271, %v254
  %304 = vrot.lane.b32.xlu0 %v145, 112
  %v305 = vpop.permute.xlu0 %304
  %306 = vrot.lane.b32.xlu0 %v148, 112
  %v307 = vpop.permute.xlu0 %306
  %308 = vrot.lane.b32.xlu0 %v153, 112
  %v309 = vpop.permute.xlu0 %308
  %310 = vrot.lane.b32.xlu0 %v156, 112
  %v311 = vpop.permute.xlu0 %310
  %312 = vrot.lane.b32.xlu0 %v161, 112
  %v313 = vpop.permute.xlu0 %312
  %314 = vrot.lane.b32.xlu0 %v164, 112
  %v315 = vpop.permute.xlu0 %314
  %316 = vrot.lane.b32.xlu0 %v169, 112
  %v317 = vpop.permute.xlu0 %316
  %318 = vrot.lane.b32.xlu0 %v172, 112
  %v319 = vpop.permute.xlu0 %318
  %320 = vrot.lane.b32.xlu0 %v177, 112
  %v321 = vpop.permute.xlu0 %320
  %322 = vrot.lane.b32.xlu0 %v180, 112
  %v323 = vpop.permute.xlu0 %322
  %324 = vrot.lane.b32.xlu0 %v185, 112
  %v325 = vpop.permute.xlu0 %324
  %326 = vrot.lane.b32.xlu0 %v188, 112
  %v327 = vpop.permute.xlu0 %326
  %328 = vrot.lane.b32.xlu0 %v193, 112
  %v329 = vpop.permute.xlu0 %328
  %330 = vrot.lane.b32.xlu0 %v196, 112
  %v331 = vpop.permute.xlu0 %330
  %332 = vrot.lane.b32.xlu0 %v201, 112
  %v333 = vpop.permute.xlu0 %332
  %334 = vrot.lane.b32.xlu0 %v204, 112
  %v335 = vpop.permute.xlu0 %334
  %vm352 = vcmask 261120
  %353 = vst.msk [vmem:[%s4] sm:$0xff] %vm352, %v305
  %354 = vst.msk [vmem:[%s4 + $0x8] sm:$0xff] %vm352, %v307
  %355 = vst.msk [vmem:[%s4 + $0x10] sm:$0xff] %vm352, %v309
  %356 = vst.msk [vmem:[%s4 + $0x18] sm:$0xff] %vm352, %v311
  %357 = vst.msk [vmem:[%s4 + $0x20] sm:$0xff] %vm352, %v313
  %358 = vst.msk [vmem:[%s4 + $0x28] sm:$0xff] %vm352, %v315
  %359 = vst.msk [vmem:[%s4 + $0x30] sm:$0xff] %vm352, %v317
  %360 = vst.msk [vmem:[%s4 + $0x38] sm:$0xff] %vm352, %v319
  %361 = vst.msk [vmem:[%s4 + $0x40] sm:$0xff] %vm352, %v321
  %362 = vst.msk [vmem:[%s4 + $0x48] sm:$0xff] %vm352, %v323
  %363 = vst.msk [vmem:[%s4 + $0x50] sm:$0xff] %vm352, %v325
  %364 = vst.msk [vmem:[%s4 + $0x58] sm:$0xff] %vm352, %v327
  %365 = vst.msk [vmem:[%s4 + $0x60] sm:$0xff] %vm352, %v329
  %366 = vst.msk [vmem:[%s4 + $0x68] sm:$0xff] %vm352, %v331
  %367 = vst.msk [vmem:[%s4 + $0x70] sm:$0xff] %vm352, %v333
  %368 = vst.msk [vmem:[%s4 + $0x78] sm:$0xff] %vm352, %v335
  // Predicated region
  $region14: #{tpu_custom_call.1} parent=0 // pred_check
    _
  $region15: #{tpu_custom_call.1} parent=0 // pred_check_branch
    %370 = sbr.rel (0) target = $region17
  $region16: #{tpu_custom_call.1} parent=0 // pred_region
    _
  $region17: #{tpu_custom_call.1} parent=0 // pred_fallthru
    _
  // Predicated region
  $region18: #{tpu_custom_call.1} parent=0 // pred_check
    _
  $region19: #{tpu_custom_call.1} parent=0 // pred_check_branch
    %372 = sbr.rel (0) target = $region21
  $region20: #{tpu_custom_call.1} parent=0 // pred_region
    _
  $region21: #{tpu_custom_call.1} parent=0 // pred_fallthru
    _
  // Predicated region
  $region22: #{tpu_custom_call.1} parent=0 // pred_check
    _
  $region23: #{tpu_custom_call.1} parent=0 // pred_check_branch
    %374 = sbr.rel (0) target = $region25
  $region24: #{tpu_custom_call.1} parent=0 // pred_region
    _
  $region25: #{tpu_custom_call.1} parent=0 // pred_fallthru
    _
  // Predicated region
  $region26: #{tpu_custom_call.1} parent=0 // pred_check
    _
  $region27: #{tpu_custom_call.1} parent=0 // pred_check_branch
    %376 = sbr.rel (0) target = $region29
  $region28: #{tpu_custom_call.1} parent=0 // pred_region
    _
  $region29: #{tpu_custom_call.1} parent=0 // pred_fallthru
    _

</llo_original>
